<compile_context>
chip_gen: v6e
topology: v6e:2x2x1
jax: 0.10.0
libtpu: 0.0.40
codegen_flags: <defaults>
</compile_context>

<pallas_src>
import jax
import jax.numpy as jnp
from jax.experimental import pallas as pl
from jax.experimental.pallas import tpu as pltpu


def _cluster_attn_kernel(h_ref, w_ref, b_ref, out_ref):
    # h_ref  : (TM, D)  node-embedding row tile (any float dtype)
    # w_ref  : (D, 1)   Linear(D, 1) weight column, f32
    # b_ref  : (1,)     bias scalar in SMEM
    # out_ref: (1, TM)  lane-dense per-node attention weights
    #
    # Relayout nodes onto the 128-lane axis in-kernel (XLU is idle relative to
    # the HBM DMA) so the D-reduction is a cheap sublane reduce and the store
    # is an unmasked lane-dense slab.
    hT = jnp.transpose(h_ref[...].astype(jnp.float32))        # (D, TM)
    prod = hT * w_ref[...]                                     # VPU; w broadcast over lanes
    # TODO(synk): chunk the D axis with a fori_loop accumulator if D grows to many hundreds.
    logits = jnp.sum(prod, axis=0, keepdims=True) + b_ref[0]   # (1, TM) sublane reduce + SMEM bias
    out_ref[...] = jax.nn.sigmoid(logits).astype(out_ref.dtype)


def _pick_tm(rows, d, *, target_bytes=4 * 1024 * 1024):
    """Row-tile size.

    - rows <= 256: one full-array block (always a legal block shape).
    - otherwise: multiple of 128, ~target_bytes per block (f32), and capped at
      ~rows/2 so there are >= 2 grid steps (v7x has 2 TensorCores).
      4 MiB blocks -> ~8 MiB double-buffered input, safe for v5e's 16 MiB
      scoped-VMEM default and v7x's 64 MiB physical VMEM.
    """
    rows = int(rows)
    if rows <= 256:
        return max(rows, 1)
    tm = max(128, (target_bytes // (4 * d)) // 128 * 128)
    half = max(128, (rows // 2) // 128 * 128)
    return int(min(tm, half))


def _attn_rows(h_rows, w_col, b, *, tm=None):
    """sigmoid(h_rows @ w_col + b) -> [R], computed with lane-dense Pallas tiles."""
    r, d = h_rows.shape
    if tm is None:
        tm = _pick_tm(r, d)
    n_grid = pl.cdiv(r, tm)

    out = pl.pallas_call(
        _cluster_attn_kernel,
        out_shape=jax.ShapeDtypeStruct((1, r), jnp.float32),
        grid_spec=pltpu.PrefetchScalarGridSpec(
            num_scalar_prefetch=0,
            grid=(n_grid,),
            in_specs=[
                pl.BlockSpec((tm, d), lambda i: (i, 0)),              # row tile of h
                pl.BlockSpec((d, 1), lambda i: (0, 0)),               # weight column (resident)
                pl.BlockSpec(memory_space=pltpu.MemorySpace.SMEM),    # bias scalar
            ],
            out_specs=pl.BlockSpec((1, tm), lambda i: (0, i)),        # lane-dense output slab
        ),
        compiler_params=pltpu.CompilerParams(
            dimension_semantics=("parallel",)),
        cost_estimate=pl.CostEstimate(
            flops=2 * r * d,
            transcendentals=r,
            bytes_accessed=r * d * h_rows.dtype.itemsize + 4 * (r + d + 1)),
    )(h_rows, w_col, b)
    return out[0]                                                     # (1, R) -> [R]


def cluster_attention(h, weight, bias, func_indices, *, gather_first=None):
    """Pallas implementation of ClusterAttention.forward.

    h            : [N, D] float32/bf16 node embeddings (cluster_graph.ndata['emb'])
    weight       : [1, D] torch Linear(embed_dim, 1).weight
    bias         : [1]    torch Linear bias
    func_indices : [M]    int32 indices into the N nodes
    returns      : [M]    float32 attention values

    gather_first: None -> auto (gather the M rows first when 3*M < N, so HBM
    traffic is O(M*D) instead of O(N*D)); True/False to force a path.
    Note: jnp.take clamps out-of-range indices (PyTorch indexing would raise).
    """
    n, d = h.shape
    m = func_indices.shape[0]
    w_col = weight.reshape(d, 1).astype(jnp.float32)   # [1, D] -> (D, 1) column
    b = bias.reshape(1).astype(jnp.float32)            # scalar -> SMEM

    if gather_first is None:
        gather_first = 3 * m < n

    if gather_first:
        # TODO(synk): fuse this gather into the kernel (scalar-prefetched indices +
        # batched per-row DMA) to drop the extra O(M*D) XLA gather pass.
        rows = jnp.take(h, func_indices, axis=0)        # [M, D]
        return _attn_rows(rows, w_col, b)

    attn_weights = _attn_rows(h, w_col, b)              # [N]  (= sigmoid(fc(h)).squeeze(-1))
    return jnp.take(attn_weights, func_indices, axis=0)  # gather -> [M]


if __name__ == "__main__":
    key = jax.random.PRNGKey(0)
    k_h, k_w, k_b, k_idx = jax.random.split(key, 4)

    N, D, M = 64, 32, 8          # nodes, embed_dim, num func_indices

    # cluster_graph.ndata['emb']
    h = jax.random.normal(k_h, (N, D), dtype=jnp.float32)
    # deterministic Linear(embed_dim, 1) parameters
    weight = jax.random.normal(k_w, (1, D), dtype=jnp.float32) * 0.1
    bias = jax.random.normal(k_b, (1,), dtype=jnp.float32) * 0.1
    # func_indices into the node set
    func_indices = jax.random.randint(k_idx, (M,), 0, N, dtype=jnp.int32)

    # pure-JAX reference
    ref = jax.nn.sigmoid(h @ weight.T + bias)[:, 0][func_indices]

    # gathered-rows path (M << N) and dense path — both use the same kernel
    out_gather = jax.block_until_ready(
        cluster_attention(h, weight, bias, func_indices, gather_first=True))
    out_dense = jax.block_until_ready(
        cluster_attention(h, weight, bias, func_indices, gather_first=False))

    assert out_gather.shape == (M,) and out_dense.shape == (M,)
    assert jnp.allclose(out_gather, ref, atol=1e-5, rtol=1e-5), (out_gather, ref)
    assert jnp.allclose(out_dense, ref, atol=1e-5, rtol=1e-5), (out_dense, ref)

    print("KERNEL_OK")
</pallas_src>

<mosaic_0001>
module attributes {stable_mosaic.version = 11 : i64} {
  func.func @_cluster_attn_kernel(%arg0: i32, %arg1: memref<8x32xf32, #tpu.memory_space<vmem>>, %arg2: memref<32x1xf32, #tpu.memory_space<vmem>>, %arg3: memref<1xf32, #tpu.memory_space<smem>>, %arg4: memref<1x8xf32, #tpu.memory_space<vmem>>) attributes {dimension_semantics = [#tpu.dimension_semantics<parallel>], iteration_bounds = array<i64: 1>, scalar_prefetch = 0 : i64, scratch_operands = 0 : i64, tpu.core_type = #tpu.core_type<tc>, window_params = [{transform_indices = @transform_0, window_bounds = array<i64: 8, 32>}, {pipeline_mode = #tpu.pipeline_mode<synchronous>, transform_indices = @transform_1, window_bounds = array<i64: 32, 1>}, {transform_indices = @transform_2, window_bounds = array<i64: 1>}, {transform_indices = @transform_3, window_bounds = array<i64: 1, 8>}]} {
    %c0 = arith.constant 0 : index
    %c0_0 = arith.constant 0 : index
    %0 = vector.load %arg1[%c0, %c0_0] : memref<8x32xf32, #tpu.memory_space<vmem>>, vector<8x32xf32>
    %1 = tpu.transpose %0, [1, 0] : vector<8x32xf32> -> vector<32x8xf32>
    %c0_1 = arith.constant 0 : index
    %c0_2 = arith.constant 0 : index
    %2 = vector.load %arg2[%c0_1, %c0_2] : memref<32x1xf32, #tpu.memory_space<vmem>>, vector<32x1xf32>
    %3 = vector.broadcast %2 : vector<32x1xf32> to vector<32x8xf32>
    %4 = arith.mulf %1, %3 : vector<32x8xf32>
    %cst = arith.constant dense<0.000000e+00> : vector<8xf32>
    %5 = vector.multi_reduction <add>, %4, %cst [0] : vector<32x8xf32> to vector<8xf32>
    %6 = vector.shape_cast %5 : vector<8xf32> to vector<1x8xf32>
    %c0_3 = arith.constant 0 : index
    %7 = memref.load %arg3[%c0_3] : memref<1xf32, #tpu.memory_space<smem>>
    %8 = vector.broadcast %7 : f32 to vector<1x8xf32>
    %9 = arith.addf %6, %8 : vector<1x8xf32>
    %10 = arith.negf %9 : vector<1x8xf32>
    %11 = math.exp %10 : vector<1x8xf32>
    %cst_4 = arith.constant 1.000000e+00 : f32
    %12 = vector.broadcast %cst_4 : f32 to vector<1x8xf32>
    %13 = arith.addf %12, %11 : vector<1x8xf32>
    %14 = arith.divf %12, %13 : vector<1x8xf32>
    %c0_5 = arith.constant 0 : index
    %c0_6 = arith.constant 0 : index
    %15 = vector.load %arg4[%c0_5, %c0_6] : memref<1x8xf32, #tpu.memory_space<vmem>>, vector<1x8xf32>
    tpu.vector_store %arg4[%c0_5, %c0_6], %14 {strides = array<i32>} : memref<1x8xf32, #tpu.memory_space<vmem>>, vector<1x8xf32>,
    return
  }
  func.func @transform_0(%arg0: i32) -> (i32, i32) {
    %c0_i32 = arith.constant 0 : i32
    %c0_i32_0 = arith.constant 0 : i32
    return %arg0, %c0_i32 : i32, i32
  }
  func.func @transform_1(%arg0: i32) -> (i32, i32) {
    %c0_i32 = arith.constant 0 : i32
    %c0_i32_0 = arith.constant 0 : i32
    %c0_i32_1 = arith.constant 0 : i32
    return %c0_i32, %c0_i32_0 : i32, i32
  }
  func.func @transform_2(%arg0: i32) -> i32 {
    %c0_i32 = arith.constant 0 : i32
    %c0_i32_0 = arith.constant 0 : i32
    return %c0_i32 : i32
  }
  func.func @transform_3(%arg0: i32) -> (i32, i32) {
    %c0_i32 = arith.constant 0 : i32
    %c0_i32_0 = arith.constant 0 : i32
    return %c0_i32, %arg0 : i32, i32
  }
}

</mosaic_0001>

<llo_original>
// kernel: tpu_custom_call.1
$region0: #{tpu_custom_call.1}
  #allocation0 [shape = 'u32[]', space=smem, size = 0x4, offset = 0x4, fixed_abs, tag = 'smem constant byte address 0x4 - core index']
  #allocation1 [shape = 'u32[144,128]{1,0:T(1,128)}', space=vmem, size = 0x12000, scoped, tag = 'internal scratch']
  #allocation2 [shape = 'f32[1]{0:T(128)S(6)}', space=smem, size = 0x200, scoped, tag = 'scoped memory for tpu_custom_call.1']
  %s0 = inlined_call_operand.vmem [shape: f32[8,32], index: 0, kind: input, shape index: {}]
  %s1 = inlined_call_operand.vmem [shape: f32[32,1], index: 1, kind: input, shape index: {}]
  %s2 = inlined_call_operand.<no memory space> [shape: f32[1], index: 2, kind: input, shape index: {}]
  %s3 = inlined_call_operand.hbm [shape: f32[1,8], index: 3, kind: output, shape index: {}]
  %s4 = sld [smem:[#allocation0]]
  $region22: #{tpu_custom_call.1} parent=0
    _
  %s6 = ssub.s32 1, %s4
  %s7 = scalar_select 0, %s6, %s4
  %8 = sst [smem:[#allocation2]] %s2
  $region1: #{tpu_custom_call.1} parent=0
    #allocation3 [shape = 'u8[512]{0}', space=vmem, size = 0x400, scoped, tag = 'output window, operand 0, single buffered']
    #allocation4 [shape = 's32[1]{0}', space=sflag, size = 0x4, scoped, tag = 'scoped memory for tpu_custom_call.1']
    %9 = vsyncpa [#allocation4], 0
    // Predicated region
    $region2: #{tpu_custom_call.1} parent=1 // pred_check
      _
    $region3: #{tpu_custom_call.1} parent=1 // pred_check_branch
      %11 = sbr.rel (0) target = $region5
    $region4: #{tpu_custom_call.1} parent=1 // pred_region
      _
    $region5: #{tpu_custom_call.1} parent=1 // pred_fallthru
      _
    // Predicated region
    $region6: #{tpu_custom_call.1} parent=1 // pred_check
      _
    $region7: #{tpu_custom_call.1} parent=1 // pred_check_branch
      %13 = sbr.rel (0) target = $region9
    $region8: #{tpu_custom_call.1} parent=1 // pred_region
      _
    $region9: #{tpu_custom_call.1} parent=1 // pred_fallthru
      _
    // Predicated region
    $region10: #{tpu_custom_call.1} parent=1 // pred_check
      _
    $region11: #{tpu_custom_call.1} parent=1 // pred_check_branch
      %15 = sbr.rel (0) target = $region13
    $region12: #{tpu_custom_call.1} parent=1 // pred_region
      _
    $region13: #{tpu_custom_call.1} parent=1 // pred_fallthru
      _
    %v16 = vld [vmem:[%s0] sm:$0xff]
    %17 = vxpose.xlu0.b32.start [1/16] %v16, 128
    %18 = vxpose.xlu0.b32.cont [2/16] 0.0, 128
    %19 = vxpose.xlu0.b32.cont [3/16] 0.0, 128
    %20 = vxpose.xlu0.b32.cont [4/16] 0.0, 128
    %21 = vxpose.xlu0.b32.cont [5/16] 0.0, 128
    %22 = vxpose.xlu0.b32.cont [6/16] 0.0, 128
    %23 = vxpose.xlu0.b32.cont [7/16] 0.0, 128
    %24 = vxpose.xlu0.b32.cont [8/16] 0.0, 128
    %25 = vxpose.xlu0.b32.cont [9/16] 0.0, 128
    %26 = vxpose.xlu0.b32.cont [10/16] 0.0, 128
    %27 = vxpose.xlu0.b32.cont [11/16] 0.0, 128
    %28 = vxpose.xlu0.b32.cont [12/16] 0.0, 128
    %29 = vxpose.xlu0.b32.cont [13/16] 0.0, 128
    %30 = vxpose.xlu0.b32.cont [14/16] 0.0, 128
    %31 = vxpose.xlu0.b32.cont [15/16] 0.0, 128
    %32 = vxpose.xlu0.b32.end [16/16] 0.0, 128
    %v33 = vpop.trf.xlu0
    %v34 = vpop.trf.xlu0
    %v35 = vpop.trf.xlu0
    %v36 = vpop.trf.xlu0
    %v37 = vpop.trf.xlu0
    %v38 = vpop.trf.xlu0
    %v39 = vpop.trf.xlu0
    %v40 = vpop.trf.xlu0
    %v41 = vpop.trf.xlu0
    %v42 = vpop.trf.xlu0
    %v43 = vpop.trf.xlu0
    %v44 = vpop.trf.xlu0
    %v45 = vpop.trf.xlu0
    %v46 = vpop.trf.xlu0
    %v47 = vpop.trf.xlu0
    %v48 = vpop.trf.xlu0
    %v49 = vld [vmem:[%s1] sm:$0xff]
    %v50 = vld [vmem:[%s1 + $0x8] sm:$0xff]
    %v51 = vld [vmem:[%s1 + $0x10] sm:$0xff]
    %v52 = vld [vmem:[%s1 + $0x18] sm:$0xff]
    %54 = vset.pattern.permute.xlu0 0
    %55 = vperm.xlu0 %54, %v49
    %v56 = vpop.permute.xlu0 %55
    %59 = vset.pattern.permute.xlu0 0
    %60 = vperm.xlu0 %59, %v50
    %v61 = vpop.permute.xlu0 %60
    %64 = vset.pattern.permute.xlu0 0
    %65 = vperm.xlu0 %64, %v51
    %v66 = vpop.permute.xlu0 %65
    %69 = vset.pattern.permute.xlu0 0
    %70 = vperm.xlu0 %69, %v52
    %v71 = vpop.permute.xlu0 %70
    %v73 = vmul.f32 %v33, %v56
    %v74 = vmul.f32 %v34, %v61
    %v75 = vmul.f32 %v35, %v66
    %v76 = vmul.f32 %v36, %v71
    %vm77 = vcmask 64512
    %v78 = vsel %vm77, %v73, 0.0
    %v79 = vsel %vm77, %v74, 0.0
    %v80 = vadd.f32 %v78, %v79
    %v81 = vsel %vm77, %v75, 0.0
    %v82 = vadd.f32 %v80, %v81
    %v83 = vsel %vm77, %v76, 0.0
    %v84 = vadd.f32 %v82, %v83
    %v85 = vrot.slane %v84, 4
    %v86 = vadd.f32 %v84, %v85
    %v87 = vrot.slane %v86, 2
    %v88 = vadd.f32 %v86, %v87
    %v89 = vrot.slane %v88, 1
    %v90 = vadd.f32 %v88, %v89
    %s91 = sld [smem:[#allocation2]]
    %v92 = vstv %s91
    %v93 = vadd.f32 %v90, %v92
    %v94 = vxor.u32 %v93, 2147483648
    %v95 = vmul.f32 %v94, 1.442695
    %v96 = vpow.pop %v95
    %v97 = vadd.f32 %v96, 1.0
    %v98 = vrcp.pop %v97
    %v99 = vmul.f32 1.0, %v98
    %vm100 = vcmask 57344
    %101 = vst.msk [vmem:[#allocation3] sm:$0x1] %vm100, %v99
    // Predicated region
    $region14: #{tpu_custom_call.1} parent=1 // pred_check
      _
    $region15: #{tpu_custom_call.1} parent=1 // pred_check_branch
      %103 = sbr.rel (0) target = $region17
    $region16: #{tpu_custom_call.1} parent=1 // pred_region
      %s105 = ssub.s32 16, 16
      %106 = vsyncadd [#allocation4], %s105
      %s108 = sshll.u32 [#allocation3], 4
      %s109 = int_to_ptr.vmem [resolvable:$true] %s108
      %111 = dma.vmem_to_hbm [thread:$0]  %s109, 16, %s3, [#allocation4]
    $region17: #{tpu_custom_call.1} parent=1 // pred_fallthru
      _
    // Predicated region
    $region18: #{tpu_custom_call.1} parent=1 // pred_check
      _
    $region19: #{tpu_custom_call.1} parent=1 // pred_check_branch
      %113 = sbr.rel (0) target = $region21
    $region20: #{tpu_custom_call.1} parent=1 // pred_region
      %114 = dma.done [#allocation4], 16
    $region21: #{tpu_custom_call.1} parent=1 // pred_fallthru
      _
    %115 = vsyncpa [#allocation4], 1

</llo_original>
